<compile_context>
chip_gen: v6e
topology: v6e:2x2x1
jax: 0.10.0
libtpu: 0.0.40
codegen_flags: <defaults>
</compile_context>

<pallas_src>
import functools

import numpy as np
import jax
import jax.numpy as jnp
from jax.experimental import pallas as pl
from jax.experimental.pallas import tpu as pltpu


def _round_up(x, m):
    return ((x + m - 1) // m) * m


# ---------------------------------------------------------------------------
# Parameter init (mirrors the PyTorch weight_init helper; host-side glue)
# ---------------------------------------------------------------------------
def weight_init(key, shape, mode, fan_in):
    if mode == 'kaiming_uniform':
        return np.sqrt(3 / fan_in) * (jax.random.uniform(key, shape, dtype=jnp.float32) * 2 - 1)
    if mode == 'kaiming_normal':
        return np.sqrt(1 / fan_in) * jax.random.normal(key, shape, dtype=jnp.float32)
    raise ValueError(f'Invalid init mode "{mode}"')


# ---------------------------------------------------------------------------
# Pallas kernel: one grid step computes an output tile (C_out, TQ)
# ---------------------------------------------------------------------------
def _conv_kernel(shifts, tq, w_ref, b_ref, *refs):
    """out tile = sum over taps of  W_tap @ x[:, shift : shift+TQ]  + bias.

    refs = (x_tile_ref, [x_next_tile_ref,] out_ref)
    w_ref : (n_taps, C_out, C_in)  resident in VMEM (constant block index)
    b_ref : (C_out, 1)             f32 (zeros when the module has no bias)
    x tile: (1, C_in, TQ)          pixel axis on lanes
    out   : (1, C_out, TQ)
    """
    o_ref = refs[-1]
    x_parts = refs[:-1]
    if len(x_parts) == 2:
        # Halo for the tap shifts: current tile ++ next tile -> (C_in, 2*TQ).
        x = jnp.concatenate([x_parts[0][0], x_parts[1][0]], axis=-1)
    else:
        x = x_parts[0][0]                                   # (C_in, TQ), single tap (1x1 conv)

    acc = None
    for t, s in enumerate(shifts):                          # static python loop over kh*kw taps
        xs = x[:, s:s + tq] if len(x_parts) == 2 else x     # static slice
        p = jnp.dot(w_ref[t], xs, preferred_element_type=jnp.float32)
        acc = p if acc is None else acc + p
    acc = acc + b_ref[...]                                  # (C_out, 1) broadcast over lanes
    o_ref[0] = acc.astype(o_ref.dtype)


# ---------------------------------------------------------------------------
# Wrapper reproducing Conv2d.forward (padding='same', optional bias, dilation)
# ---------------------------------------------------------------------------
def conv2d_same(x, weight, bias=None, dilation=1, *,
                compute_dtype=jnp.bfloat16, lane_tile=512):
    """x: (B, C_in, H, W), weight: (C_out, C_in, kh, kw), bias: (C_out,) or None."""
    B, C_in, H, W = x.shape
    C_out, C_in_w, kh, kw = weight.shape
    assert C_in_w == C_in, (C_in_w, C_in)
    if isinstance(dilation, (tuple, list)):
        dh, dw = dilation
    else:
        dh = dw = int(dilation)

    out_dtype = x.dtype
    cdt = jnp.dtype(compute_dtype) if compute_dtype is not None else x.dtype

    # 'same' zero padding (PyTorch puts the extra element on the bottom/right).
    th, tw = dh * (kh - 1), dw * (kw - 1)
    ph0, pw0 = th // 2, tw // 2
    if th or tw:
        xp = jnp.pad(x, ((0, 0), (0, 0), (ph0, th - ph0), (pw0, tw - pw0)))
    else:
        xp = x                                              # 1x1 default path: no pad pass at all
    Hp, Wp = H + th, W + tw

    # Flatten the padded plane; output pixel q = y*Wp + col, so tap (ky, kx) reads the
    # same buffer at flat offset q + ky*dh*Wp + kx*dw (never wraps for valid columns).
    shifts = tuple(ky * dh * Wp + kx * dw for ky in range(kh) for kx in range(kw))
    max_shift = shifts[-1]
    Q = H * Wp                                              # flat output length

    # Lane-dense pixel tiles (multiple of 128); a tile must also cover the tap halo.
    tq = min(_round_up(lane_tile, 128), _round_up(Q, 128))
    tq = max(tq, _round_up(max(max_shift, 1), 128))
    Qp = _round_up(Q, tq)
    n_q = Qp // tq
    need_halo = max_shift > 0
    Lx = Qp + (tq if need_halo else 0)                      # extra zero tile so block q+1 exists

    x_flat = xp.reshape(B, C_in, Hp * Wp)
    if Lx > Hp * Wp:
        x_flat = jnp.pad(x_flat, ((0, 0), (0, 0), (0, Lx - Hp * Wp)))
    x_flat = x_flat.astype(cdt)

    # Tap-major weight (n_taps, C_out, C_in); resident in VMEM for the whole grid.
    w_taps = jnp.transpose(weight.reshape(C_out, C_in, kh * kw), (2, 0, 1)).astype(cdt)
    b_arr = (jnp.zeros((C_out, 1), jnp.float32) if bias is None
             else jnp.asarray(bias, jnp.float32).reshape(C_out, 1))

    in_specs = [
        pl.BlockSpec((kh * kw, C_out, C_in), lambda b, q: (0, 0, 0)),   # weight (resident)
        pl.BlockSpec((C_out, 1), lambda b, q: (0, 0)),                  # bias   (resident)
        pl.BlockSpec((1, C_in, tq), lambda b, q: (b, 0, q)),            # x tile q
    ]
    args = [w_taps, b_arr, x_flat]
    if need_halo:
        in_specs.append(pl.BlockSpec((1, C_in, tq), lambda b, q: (b, 0, q + 1)))
        args.append(x_flat)                                             # same buffer, next tile

    out_flat = pl.pallas_call(
        functools.partial(_conv_kernel, shifts, tq),
        out_shape=jax.ShapeDtypeStruct((B, C_out, Qp), out_dtype),
        grid=(B, n_q),
        in_specs=in_specs,
        out_specs=pl.BlockSpec((1, C_out, tq), lambda b, q: (b, 0, q)),
        compiler_params=pltpu.CompilerParams(
            dimension_semantics=("parallel", "parallel"),
            vmem_limit_bytes=32 * 1024 * 1024),
    )(*args)

    # Un-flatten: keep valid pixels only (junk lanes live in [W, Wp) of each row / [Q, Qp)).
    out = out_flat[:, :, :Q].reshape(B, C_out, H, Wp)[:, :, :, :W]
    return out


# ---------------------------------------------------------------------------
# NumPy reference (mirrors F.conv2d(..., padding='same', dilation=d) + bias)
# ---------------------------------------------------------------------------
def _ref_conv2d_same(x, w, b, dilation):
    x = np.asarray(x, np.float32)
    w = np.asarray(w, np.float32)
    B, C_in, H, W = x.shape
    C_out, _, kh, kw = w.shape
    dh, dw = dilation if isinstance(dilation, (tuple, list)) else (dilation, dilation)
    th, tw = dh * (kh - 1), dw * (kw - 1)
    ph0, pw0 = th // 2, tw // 2
    xp = np.pad(x, ((0, 0), (0, 0), (ph0, th - ph0), (pw0, tw - pw0)))
    out = np.zeros((B, C_out, H, W), np.float32)
    for ky in range(kh):
        for kx in range(kw):
            xs = xp[:, :, ky * dh:ky * dh + H, kx * dw:kx * dw + W]
            out += np.einsum('oi,bihw->bohw', w[:, :, ky, kx], xs)
    if b is not None:
        out += np.asarray(b, np.float32).reshape(1, -1, 1, 1)
    return out


if __name__ == "__main__":
    key = jax.random.PRNGKey(0)
    k1, k2, k3, k4 = jax.random.split(key, 4)

    B, C_in, H, W = 2, 4, 16, 16
    x = jax.random.normal(k1, (B, C_in, H, W), dtype=jnp.float32)

    # --- Case 1: module defaults  Conv2d(kernel=(1,1), bias=False), f32 compute ---
    C_out1 = 8
    w1 = weight_init(k2, (C_out1, C_in, 1, 1), 'kaiming_normal', C_in * 1 * 1)
    y1 = jax.block_until_ready(conv2d_same(x, w1, None, dilation=1,
                                           compute_dtype=jnp.float32))
    ref1 = _ref_conv2d_same(x, w1, None, (1, 1))
    assert y1.shape == (B, C_out1, H, W), y1.shape
    np.testing.assert_allclose(np.asarray(y1), ref1, rtol=2e-2, atol=2e-2)

    # --- Case 2: 3x3 kernel, dilation=2, bias=True, bf16 MXU compute, small lane tile
    #             (exercises the multi-tile + halo path) ---
    C_out2 = 4
    w2 = weight_init(k3, (C_out2, C_in, 3, 3), 'kaiming_normal', C_in * 3 * 3)
    b2 = 0.1 * jax.random.normal(k4, (C_out2,), dtype=jnp.float32)
    y2 = jax.block_until_ready(conv2d_same(x, w2, b2, dilation=2,
                                           compute_dtype=jnp.bfloat16,
                                           lane_tile=128))
    ref2 = _ref_conv2d_same(x, w2, b2, (2, 2))
    assert y2.shape == (B, C_out2, H, W), y2.shape
    np.testing.assert_allclose(np.asarray(y2), ref2, rtol=3e-2, atol=3e-2)

    print("KERNEL_OK")
</pallas_src>

<mosaic_0001>
module attributes {stable_mosaic.version = 11 : i64} {
  func.func @_conv_kernel(%arg0: i32, %arg1: i32, %arg2: memref<1x8x4xf32, #tpu.memory_space<vmem>>, %arg3: memref<8x1xf32, #tpu.memory_space<vmem>>, %arg4: memref<1x4x256xf32, #tpu.memory_space<vmem>>, %arg5: memref<1x8x256xf32, #tpu.memory_space<vmem>>) attributes {dimension_semantics = [#tpu.dimension_semantics<parallel>, #tpu.dimension_semantics<parallel>], iteration_bounds = array<i64: 2, 1>, scalar_prefetch = 0 : i64, scratch_operands = 0 : i64, tpu.core_type = #tpu.core_type<tc>, window_params = [{pipeline_mode = #tpu.pipeline_mode<synchronous>, transform_indices = @transform_0, window_bounds = array<i64: 1, 8, 4>}, {pipeline_mode = #tpu.pipeline_mode<synchronous>, transform_indices = @transform_1, window_bounds = array<i64: 8, 1>}, {transform_indices = @transform_2, window_bounds = array<i64: 1, 4, 256>}, {transform_indices = @transform_3, window_bounds = array<i64: 1, 8, 256>}]} {
    %c0 = arith.constant 0 : index
    %c0_0 = arith.constant 0 : index
    %c0_1 = arith.constant 0 : index
    %0 = vector.load %arg4[%c0, %c0_0, %c0_1] : memref<1x4x256xf32, #tpu.memory_space<vmem>>, vector<1x4x256xf32>
    %1 = vector.shape_cast %0 : vector<1x4x256xf32> to vector<4x256xf32>
    %c0_2 = arith.constant 0 : index
    %c0_3 = arith.constant 0 : index
    %c0_4 = arith.constant 0 : index
    %2 = vector.load %arg2[%c0_2, %c0_3, %c0_4] : memref<1x8x4xf32, #tpu.memory_space<vmem>>, vector<1x8x4xf32>
    %3 = vector.shape_cast %2 : vector<1x8x4xf32> to vector<8x4xf32>
    %cst = arith.constant dense<0.000000e+00> : vector<8x256xf32>
    %4 = tpu.matmul %3, %1, %cst {dimension_numbers = #tpu.dot_dimension_numbers<[1], [0], [0], [1], [0, 0, 1, 1], [], []>} : vector<8x4xf32>, vector<4x256xf32>, vector<8x256xf32> -> vector<8x256xf32>
    %c0_5 = arith.constant 0 : index
    %c0_6 = arith.constant 0 : index
    %5 = vector.load %arg3[%c0_5, %c0_6] : memref<8x1xf32, #tpu.memory_space<vmem>>, vector<8x1xf32>
    %6 = vector.broadcast %5 : vector<8x1xf32> to vector<8x256xf32>
    %7 = arith.addf %4, %6 : vector<8x256xf32>
    %c0_7 = arith.constant 0 : index
    %c0_8 = arith.constant 0 : index
    %c0_9 = arith.constant 0 : index
    %8 = vector.load %arg5[%c0_7, %c0_8, %c0_9] : memref<1x8x256xf32, #tpu.memory_space<vmem>>, vector<1x8x256xf32>
    %9 = vector.shape_cast %8 : vector<1x8x256xf32> to vector<8x256xf32>
    %10 = vector.shape_cast %7 : vector<8x256xf32> to vector<1x8x256xf32>
    tpu.vector_store %arg5[%c0_7, %c0_8, %c0_9], %10 {strides = array<i32>} : memref<1x8x256xf32, #tpu.memory_space<vmem>>, vector<1x8x256xf32>,
    return
  }
  func.func @transform_0(%arg0: i32, %arg1: i32) -> (i32, i32, i32) {
    %c0_i32 = arith.constant 0 : i32
    %c0_i32_0 = arith.constant 0 : i32
    %c0_i32_1 = arith.constant 0 : i32
    %c0_i32_2 = arith.constant 0 : i32
    return %c0_i32, %c0_i32_0, %c0_i32_1 : i32, i32, i32
  }
  func.func @transform_1(%arg0: i32, %arg1: i32) -> (i32, i32) {
    %c0_i32 = arith.constant 0 : i32
    %c0_i32_0 = arith.constant 0 : i32
    %c0_i32_1 = arith.constant 0 : i32
    return %c0_i32, %c0_i32_0 : i32, i32
  }
  func.func @transform_2(%arg0: i32, %arg1: i32) -> (i32, i32, i32) {
    %c0_i32 = arith.constant 0 : i32
    %c0_i32_0 = arith.constant 0 : i32
    return %arg0, %c0_i32, %arg1 : i32, i32, i32
  }
  func.func @transform_3(%arg0: i32, %arg1: i32) -> (i32, i32, i32) {
    %c0_i32 = arith.constant 0 : i32
    %c0_i32_0 = arith.constant 0 : i32
    return %arg0, %c0_i32, %arg1 : i32, i32, i32
  }
}

</mosaic_0001>

<llo_original>
// kernel: tpu_custom_call.1
$region0: #{tpu_custom_call.1}
  #allocation0 [shape = 'u32[]', space=smem, size = 0x4, offset = 0x4, fixed_abs, tag = 'smem constant byte address 0x4 - core index']
  #allocation1 [shape = 'u32[144,128]{1,0:T(1,128)}', space=vmem, size = 0x12000, scoped, tag = 'internal scratch']
  %s0 = inlined_call_operand.vmem [shape: f32[1,8,4], index: 0, kind: input, shape index: {}]
  %s1 = inlined_call_operand.vmem [shape: f32[8,1], index: 1, kind: input, shape index: {}]
  %s2 = inlined_call_operand.vmem [shape: f32[2,4,256], index: 2, kind: input, shape index: {}]
  %s3 = inlined_call_operand.hbm [shape: f32[2,8,256], index: 3, kind: output, shape index: {}]
  %s4 = sld [smem:[#allocation0]]
  $region45: #{tpu_custom_call.1} parent=0
    _
  %s6 = ssub.s32 1, %s4
  %s7 = scalar_select 0, %s6, %s4
  $region1: #{tpu_custom_call.1} parent=0
    #allocation2 [shape = 'u8[16384]{0}', space=vmem, size = 0x4000, scoped, tag = 'output window, operand 0']
    #allocation3 [shape = 's32[2]{0}', space=sflag, size = 0x8, scoped, tag = 'scoped memory for tpu_custom_call.1']
    %8 = vsyncpa [#allocation3], 0
    %s9 = scalar_lea.sflag [#allocation3], 1
    %10 = vsyncpa %s9, 0
    loop: start=0, step=1, limit=4
    $region2: #{tpu_custom_call.1} parent=1 // loop_pre_header
      _
    $region3: #{tpu_custom_call.1} parent=1 // loop_header
      %s12 = sphi 0, %s16
      %p13 = scmp.ge.s32.totalorder %s12, 4
      %s19 = sphi 0, %s31
      %s20 = sphi 0, %s27
      %s21 = sphi 0, %s19
      %s22 = sphi 0, %s20
      %s23 = sphi 0, %s21
      %s24 = sphi 0, %s22
      %s32 = sphi 0, %s32
      %s34 = sphi 0, %s32
      %s35 = sphi 0, %s34
      %s49 = sphi 0, %s35
      %s53 = sphi 0, %s53
      %s55 = sphi 0, %s53
      %s56 = sphi 0, %s55
      %s70 = sphi 0, %s56
      %s78 = sphi 0, %s80
      %s81 = sphi 0, %s78
      %s82 = sphi 0, %s81
      %s98 = sphi 0, %s82
      %s106 = sphi 0, %s108
      %s109 = sphi 0, %s106
      %s110 = sphi 0, %s109
      %s126 = sphi 0, %s110
    $region4: #{tpu_custom_call.1} parent=1 // loop_header_branch
      %15 = sbr.rel (%p13) target = $region8
    $region5: #{tpu_custom_call.1} parent=1 // loop_body
      %s17 = ssub.s32 %s12, 1
      %s18 = ssub.s32 %s12, 2
      %s25 = sadd.s32 1, %s20
      %p26 = scmp.ge.s32.totalorder %s25, 1
      %s27 = scalar_select %p26, 0, %s25
      %s28 = sadd.s32 1, %s19
      %s29 = scalar_select %p26, %s28, %s19
      %p30 = scmp.ge.s32.totalorder %s29, 2
      %s31 = scalar_select %p30, 0, %s29
      %s33 = sadd.s32 %s32, 1
      %p36 = scmp.eq.s32.totalorder %s12, 1
      %p37 = scmp.ne.s32.totalorder %s32, %s34
      %p38 = scmp.eq.s32.totalorder %s12, 0
      %p39 = por %p37, %p38
      %p40 = scmp.ne.s32.totalorder %s32, %s34
      %p41 = scmp.eq.s32.totalorder %s17, 1
      %p42 = por %p40, %p41
      %p43 = scmp.ne.s32.totalorder %s34, %s35
      %p44 = scmp.eq.s32.totalorder %s17, 0
      %p45 = por %p43, %p44
      %p46 = scmp.ne.s32.totalorder %s34, %s35
      %p47 = scmp.eq.s32.totalorder %s18, 1
      %p48 = por %p46, %p47
      %p50 = scmp.ne.s32.totalorder %s35, %s49
      %p51 = scmp.eq.s32.totalorder %s18, 0
      %p52 = por %p50, %p51
      %s54 = sadd.s32 %s53, 1
      %p57 = scmp.eq.s32.totalorder %s12, 1
      %p58 = scmp.ne.s32.totalorder %s53, %s55
      %p59 = scmp.eq.s32.totalorder %s12, 0
      %p60 = por %p58, %p59
      %p61 = scmp.ne.s32.totalorder %s53, %s55
      %p62 = scmp.eq.s32.totalorder %s17, 1
      %p63 = por %p61, %p62
      %p64 = scmp.ne.s32.totalorder %s55, %s56
      %p65 = scmp.eq.s32.totalorder %s17, 0
      %p66 = por %p64, %p65
      %p67 = scmp.ne.s32.totalorder %s55, %s56
      %p68 = scmp.eq.s32.totalorder %s18, 1
      %p69 = por %p67, %p68
      %p71 = scmp.ne.s32.totalorder %s56, %s70
      %p72 = scmp.eq.s32.totalorder %s18, 0
      %p73 = por %p71, %p72
      %s74 = ssub.s32 %s19, %s31
      %s75 = ssub.s32 %s20, %s27
      %s76 = sor.u32 %s74, %s75
      %p77 = scmp.eq.s32.totalorder %s76, 0
      %s79 = sadd.s32 %s78, 1
      %s80 = scalar_select %p77, %s78, %s79
      %p83 = pneg %p77
      %p84 = scmp.eq.s32.totalorder %s12, 1
      %p85 = por %p83, %p84
      %p86 = scmp.ne.s32.totalorder %s78, %s81
      %p87 = scmp.eq.s32.totalorder %s12, 0
      %p88 = por %p86, %p87
      %p89 = scmp.ne.s32.totalorder %s78, %s81
      %p90 = scmp.eq.s32.totalorder %s17, 1
      %p91 = por %p89, %p90
      %p92 = scmp.ne.s32.totalorder %s81, %s82
      %p93 = scmp.eq.s32.totalorder %s17, 0
      %p94 = por %p92, %p93
      %p95 = scmp.ne.s32.totalorder %s81, %s82
      %p96 = scmp.eq.s32.totalorder %s18, 1
      %p97 = por %p95, %p96
      %p99 = scmp.ne.s32.totalorder %s82, %s98
      %p100 = scmp.eq.s32.totalorder %s18, 0
      %p101 = por %p99, %p100
      %s102 = ssub.s32 %s19, %s31
      %s103 = ssub.s32 %s20, %s27
      %s104 = sor.u32 %s102, %s103
      %p105 = scmp.eq.s32.totalorder %s104, 0
      %s107 = sadd.s32 %s106, 1
      %s108 = scalar_select %p105, %s106, %s107
      %p111 = pneg %p105
      %p112 = scmp.eq.s32.totalorder %s12, 1
      %p113 = por %p111, %p112
      %p114 = scmp.ne.s32.totalorder %s106, %s109
      %p115 = scmp.eq.s32.totalorder %s12, 0
      %p116 = por %p114, %p115
      %p117 = scmp.ne.s32.totalorder %s106, %s109
      %p118 = scmp.eq.s32.totalorder %s17, 1
      %p119 = por %p117, %p118
      %p120 = scmp.ne.s32.totalorder %s109, %s110
      %p121 = scmp.eq.s32.totalorder %s17, 0
      %p122 = por %p120, %p121
      %p123 = scmp.ne.s32.totalorder %s109, %s110
      %p124 = scmp.eq.s32.totalorder %s18, 1
      %p125 = por %p123, %p124
      %p127 = scmp.ne.s32.totalorder %s110, %s126
      %p128 = scmp.eq.s32.totalorder %s18, 0
      %p129 = por %p127, %p128
      %p130 = scmp.le.s32.totalorder 1, %s12
      %p131 = scmp.lt.s32.totalorder %s12, 3
      %p132 = pnand %p130, %p131
      %p133 = pneg %p132
      // Predicated region
      $region9: #{tpu_custom_call.1} parent=5 // pred_check
        _
      $region10: #{tpu_custom_call.1} parent=5 // pred_check_branch
        %135 = sbr.rel (%p132) target = $region12
      $region11: #{tpu_custom_call.1} parent=5 // pred_region
        %s136 = ssub.s32 %s12, 1
        // Predicated region
        $region13: #{tpu_custom_call.1} parent=11 // pred_check
          %p137 = pneg %p45
        $region14: #{tpu_custom_call.1} parent=11 // pred_check_branch
          %139 = sbr.rel (%p137) target = $region16
        $region15: #{tpu_custom_call.1} parent=11 // pred_region
          _
        $region16: #{tpu_custom_call.1} parent=11 // pred_fallthru
          _
        // Predicated region
        $region17: #{tpu_custom_call.1} parent=11 // pred_check
          %p140 = pneg %p66
        $region18: #{tpu_custom_call.1} parent=11 // pred_check_branch
          %142 = sbr.rel (%p140) target = $region20
        $region19: #{tpu_custom_call.1} parent=11 // pred_region
          _
        $region20: #{tpu_custom_call.1} parent=11 // pred_fallthru
          _
      $region12: #{tpu_custom_call.1} parent=5 // pred_fallthru
        _
      %p143 = scmp.lt.s32.totalorder %s12, 2
      // Predicated region
      $region21: #{tpu_custom_call.1} parent=5 // pred_check
        %p144 = pneg %p143
      $region22: #{tpu_custom_call.1} parent=5 // pred_check_branch
        %146 = sbr.rel (%p144) target = $region24
      $region23: #{tpu_custom_call.1} parent=5 // pred_region
        // Predicated region
        $region25: #{tpu_custom_call.1} parent=23 // pred_check
          %p147 = pneg %p88
        $region26: #{tpu_custom_call.1} parent=23 // pred_check_branch
          %149 = sbr.rel (%p147) target = $region28
        $region27: #{tpu_custom_call.1} parent=23 // pred_region
          %s150 = smul.u32 2, %s20
          %p151 = scmp.lt.s32.totalorder %s19, 1
          %s152 = scalar_select %p151, %s19, 1
          %p153 = scmp.lt.s32.totalorder %s150, 1
          %s154 = scalar_select %p153, %s150, 1
          %s155 = smul.addr %s152, 2
          %s156 = sadd.s32 %s154, %s155
          %s157 = smul.addr %s156, 4
          %s158 = scalar_lea.vmem %s2, %s157
          %s159 = smul.u32 2, %s20
        $region28: #{tpu_custom_call.1} parent=23 // pred_fallthru
          _
      $region24: #{tpu_custom_call.1} parent=5 // pred_fallthru
        _
      %p160 = scmp.le.s32.totalorder 1, %s12
      %p161 = scmp.lt.s32.totalorder %s12, 3
      %p162 = pnand %p160, %p161
      %p163 = pneg %p162
      // Predicated region
      $region29: #{tpu_custom_call.1} parent=5 // pred_check
        _
      $region30: #{tpu_custom_call.1} parent=5 // pred_check_branch
        %165 = sbr.rel (%p162) target = $region32
      $region31: #{tpu_custom_call.1} parent=5 // pred_region
        %s166 = ssub.s32 %s12, 1
        %p167 = pneg %p45
        %p168 = pneg %p42
        %p169 = pneg %p66
        %p170 = pneg %p63
        %s171 = smul.u32 2, %s22
        %p172 = scmp.lt.s32.totalorder %s21, 1
        %s173 = scalar_select %p172, %s21, 1
        %p174 = scmp.lt.s32.totalorder %s171, 1
        %s175 = scalar_select %p174, %s171, 1
        %s176 = smul.addr %s173, 2
        %s177 = sadd.s32 %s175, %s176
        %s178 = smul.addr %s177, 4
        %s179 = scalar_lea.vmem %s2, %s178
        %p180 = pneg %p94
        %p181 = pneg %p91
        %p182 = pneg %p122
        %p183 = pneg %p119
        %s184 = sand.u32 %s109, 1
        %s185 = scalar_lea.sflag [#allocation3], %s184
        %s186 = sand.u32 %s109, 1
        %s187 = smul.addr %s186, 16
        %s188 = scalar_lea.vmem [#allocation2], %s187
        %s189 = smul.u32 2, %s22
        %p190 = scmp.lt.s32.totalorder %s21, 1
        %s191 = scalar_select %p190, %s21, 1
        %p192 = scmp.lt.s32.totalorder %s189, 1
        %s193 = scalar_select %p192, %s189, 1
        %s194 = smul.addr %s191, 2
        %s195 = sadd.s32 %s193, %s194
        %s196 = smul.addr %s195, 4
        %s197 = scalar_lea.vmem %s2, %s196
        %s198 = smul.u32 2, %s22
        %s199 = smul.u32 2, %s22
        %v200 = vld [vmem:[%s197] sm:$0xff]
        %v201 = vld [vmem:[%s0] sm:$0xff]
        %v202 = vld [vmem:[%s1] sm:$0xff]
        %204 = vset.pattern.permute.xlu0 0
        %205 = vperm.xlu0 %204, %v202
        %v206 = vpop.permute.xlu0 %205
        %v209 = vcombine.high %v200, %v200
        %vm210 = vcmask 31744
        %v212 = vsel %vm210, %v201, 0
        %vm214 = vcmask 1043456
        %v215 = vsel %vm214, %v200, 0
        %v217 = vsel %vm214, %v209, 0
        %219 = vmatprep.subr.mxu0 0.0
        %220 = vmatpush1.msra.mxu0 0.0
        %221 = vmatprep.subr.mxu0 0.0
        %222 = vmatpush1.msra.mxu0 0.0
        %223 = vmatprep.subr.mxu0 0.0
        %224 = vmatpush1.msra.mxu0 0.0
        %225 = vmatprep.subr.mxu0 0.0
        %226 = vmatpush1.msra.mxu0 0.0
        %227 = vmatprep.subr.mxu0 0.0
        %228 = vmatpush1.msra.mxu0 0.0
        %229 = vmatprep.subr.mxu0 0.0
        %230 = vmatpush1.msra.mxu0 0.0
        %231 = vmatprep.subr.mxu0 0.0
        %232 = vmatpush1.msra.mxu0 0.0
        %233 = vmatprep.subr.mxu0 0.0
        %234 = vmatpush1.msra.mxu0 0.0
        %235 = vmatprep.subr.mxu0 0.0
        %236 = vmatpush1.msra.mxu0 0.0
        %237 = vmatprep.subr.mxu0 0.0
        %238 = vmatpush1.msra.mxu0 0.0
        %239 = vmatprep.subr.mxu0 0.0
        %240 = vmatpush1.msra.mxu0 0.0
        %241 = vmatprep.subr.mxu0 0.0
        %242 = vmatpush1.msra.mxu0 0.0
        %243 = vmatprep.subr.mxu0 0.0
        %244 = vmatpush1.msra.mxu0 0.0
        %245 = vmatprep.subr.mxu0 0.0
        %246 = vmatpush1.msra.mxu0 0.0
        %247 = vmatprep.subr.mxu0 0.0
        %248 = vmatpush1.msra.mxu0 0.0
        %249 = vmatprep.subr.mxu0 %v217
        %250 = vmatpush1.msra.mxu0 %v215
        %251 = vmatprep.subr.mxu0 0.0
        %252 = vmatpush2.msra.mxu0 0.0
        %253 = vmatprep.subr.mxu0 0.0
        %254 = vmatpush2.msra.mxu0 0.0
        %255 = vmatprep.subr.mxu0 0.0
        %256 = vmatpush2.msra.mxu0 0.0
        %257 = vmatprep.subr.mxu0 0.0
        %258 = vmatpush2.msra.mxu0 0.0
        %259 = vmatprep.subr.mxu0 0.0
        %260 = vmatpush2.msra.mxu0 0.0
        %261 = vmatprep.subr.mxu0 0.0
        %262 = vmatpush2.msra.mxu0 0.0
        %263 = vmatprep.subr.mxu0 0.0
        %264 = vmatpush2.msra.mxu0 0.0
        %265 = vmatprep.subr.mxu0 0.0
        %266 = vmatpush2.msra.mxu0 0.0
        %267 = vmatprep.subr.mxu0 0.0
        %268 = vmatpush2.msra.mxu0 0.0
        %269 = vmatprep.subr.mxu0 0.0
        %270 = vmatpush2.msra.mxu0 0.0
        %271 = vmatprep.subr.mxu0 0.0
        %272 = vmatpush2.msra.mxu0 0.0
        %273 = vmatprep.subr.mxu0 0.0
        %274 = vmatpush2.msra.mxu0 0.0
        %275 = vmatprep.subr.mxu0 0.0
        %276 = vmatpush2.msra.mxu0 0.0
        %277 = vmatprep.subr.mxu0 0.0
        %278 = vmatpush2.msra.mxu0 0.0
        %279 = vmatprep.subr.mxu0 0.0
        %280 = vmatpush2.msra.mxu0 0.0
        %281 = vmatprep.subr.mxu0 0.0
        %282 = vmatpush2.msra.mxu0 0.0
        %283 = vmatprep.mubr.f32.mxu0 0.0
        %284 = vmatmul.mubr.f32.gmra.mxu0 %v212
        %v285 = vpop.f32.mrf.mxu0
        %v286 = vadd.f32 %v206, %v285
        %v287 = vpop.f32.mrf.mxu0
        %v288 = vadd.f32 %v206, %v287
        %289 = vdwg.mxu0
        %290 = vst [vmem:[%s188] sm:$0xff] %v286
        %291 = vst [vmem:[%s188 + $0x8] sm:$0xff] %v288
        %s292 = sand.u32 %s109, 1
        %s293 = scalar_lea.sflag [#allocation3], %s292
        %s294 = sand.u32 %s109, 1
        %s295 = smul.addr %s294, 16
        %s296 = scalar_lea.vmem [#allocation2], %s295
        // Predicated region
        $region33: #{tpu_custom_call.1} parent=31 // pred_check
          %p297 = pneg %p119
        $region34: #{tpu_custom_call.1} parent=31 // pred_check_branch
          %299 = sbr.rel (%p297) target = $region36
        $region35: #{tpu_custom_call.1} parent=31 // pred_region
          %s300 = smul.u32 2, %s22
          %s302 = ssub.s32 256, 256
          %303 = vsyncadd %s293, %s302
          %s304 = smul.addr %s21, 2
          %s305 = sadd.s32 %s300, %s304
          %s306 = smul.addr %s305, 128
          %s307 = scalar_lea.hbm %s3, %s306
          %s309 = sshll.u32 %s296, 4
          %s310 = int_to_ptr.vmem [resolvable:$true] %s309
          %312 = dma.vmem_to_hbm [thread:$0]  %s310, 256, %s307, %s293
        $region36: #{tpu_custom_call.1} parent=31 // pred_fallthru
          _
      $region32: #{tpu_custom_call.1} parent=5 // pred_fallthru
        _
      %p313 = scmp.le.s32.totalorder 2, %s12
      // Predicated region
      $region37: #{tpu_custom_call.1} parent=5 // pred_check
        %p314 = pneg %p313
      $region38: #{tpu_custom_call.1} parent=5 // pred_check_branch
        %316 = sbr.rel (%p314) target = $region40
      $region39: #{tpu_custom_call.1} parent=5 // pred_region
        %s317 = ssub.s32 %s12, 2
        // Predicated region
        $region41: #{tpu_custom_call.1} parent=39 // pred_check
          %p318 = pneg %p125
        $region42: #{tpu_custom_call.1} parent=39 // pred_check_branch
          %320 = sbr.rel (%p318) target = $region44
        $region43: #{tpu_custom_call.1} parent=39 // pred_region
          %s321 = sand.u32 %s110, 1
          %s322 = scalar_lea.sflag [#allocation3], %s321
          %s323 = sand.u32 %s110, 1
          %s324 = smul.addr %s323, 16
          %s325 = scalar_lea.vmem [#allocation2], %s324
          %326 = dma.done %s322, 256
        $region44: #{tpu_custom_call.1} parent=39 // pred_fallthru
          _
      $region40: #{tpu_custom_call.1} parent=5 // pred_fallthru
        _
    $region6: #{tpu_custom_call.1} parent=1 // loop_footer
      %s16 = sadd.s32 1, %s12
    $region7: #{tpu_custom_call.1} parent=1 // loop_footer_branch
      %11 = sbr.rel target = $region3
    $region8: #{tpu_custom_call.1} parent=1 // loop_exit
      _
    %327 = vsyncpa [#allocation3], 1
    %s328 = scalar_lea.sflag [#allocation3], 1
    %329 = vsyncpa %s328, 1

</llo_original>
